<compile_context>
chip_gen: v6e
topology: v6e:2x2x1
jax: 0.10.0
libtpu: 0.0.40
codegen_flags: <defaults>
</compile_context>

<pallas_src>
import jax
import jax.numpy as jnp
from jax.experimental import pallas as pl
from jax.experimental.pallas import tpu as pltpu

LANE = 128
NUM_LAYERS = 3


def _round_up(x, m):
    return (x + m - 1) // m * m


def _scoring_kernel(x_ref, w1_ref, b1_ref, w2_ref, b2_ref, w3_ref, b3_ref,
                    o_ref):
    """One row tile of the 3-layer MLP, emitting packed lane-dense scores."""
    rt, d_in = x_ref.shape
    hid = w1_ref.shape[1]
    r, lane = o_ref.shape[1], o_ref.shape[2]   # rt == r * lane

    # ---- Layer 1: tiny-K (input_dims ~ 2) -> broadcast FMAs on the VPU, f32.
    x = x_ref[...]                                     # (rt, d_in) f32
    h = x[:, 0:1] * w1_ref[0:1, :]                     # (rt,1)*(1,hid)->(rt,hid)
    for k in range(1, d_in):                           # static, tiny trip count
        h = h + x[:, k:k + 1] * w1_ref[k:k + 1, :]
    h = jnp.maximum(h + b1_ref[...], 0.0)              # bias + ReLU in f32

    # ---- Layer 2: bf16 MXU matmul with f32 accumulation; bias + ReLU in f32.
    h = jnp.dot(h.astype(jnp.bfloat16), w2_ref[...],
                preferred_element_type=jnp.float32)
    h = jnp.maximum(h + b2_ref[...], 0.0)              # (rt, hid) f32

    # ---- Layer 3 (single output unit): VPU multiply by the real w3 row, then
    # a lane reduce (XLU), producing the packed (r, 128) output layout.
    hw = h * w3_ref[...]                               # (rt, hid) f32
    scores = jnp.sum(hw.reshape(r, lane, hid), axis=-1) + b3_ref[...]  # (r,lane)
    o_ref[...] = scores[None].astype(o_ref.dtype)      # (1, r, lane)


def pack_params(params):
    """params: list of (W [out, in] f32, b [out] f32) in PyTorch layout.

    Returns (w1 f32 [d_in, hid_p], b1 f32 [1, hid_p],
             w2 bf16 [hid_p, hid_p], b2 f32 [1, hid_p],
             w3 f32 [1, hid_p],      b3 f32 [1, 1])
    with the hidden dim zero-padded to a multiple of 128 (lane-dense); the
    input feature dim and the scalar output are NOT padded.
    """
    assert len(params) == NUM_LAYERS
    (w1, b1), (w2, b2), (w3, b3) = params
    hid = w1.shape[0]
    hid_p = _round_up(hid, LANE)
    ph = hid_p - hid

    w1p = jnp.pad(w1.T, ((0, 0), (0, ph))).astype(jnp.float32)      # (d_in, hid_p)
    b1p = jnp.pad(b1.reshape(1, -1), ((0, 0), (0, ph))).astype(jnp.float32)
    w2p = jnp.pad(w2.T, ((0, ph), (0, ph))).astype(jnp.bfloat16)    # (hid_p, hid_p)
    b2p = jnp.pad(b2.reshape(1, -1), ((0, 0), (0, ph))).astype(jnp.float32)
    w3p = jnp.pad(w3.reshape(1, -1), ((0, 0), (0, ph))).astype(jnp.float32)
    b3p = b3.reshape(1, 1).astype(jnp.float32)
    return (w1p, b1p, w2p, b2p, w3p, b3p)


def scoring_func_forward(x, packed, *, row_tile=1024):
    """x: [N, input_dims] f32. packed: output of pack_params. Returns [N, 1]."""
    w1p, b1p, w2p, b2p, w3p, b3p = packed
    n, d_in = x.shape
    hid_p = w1p.shape[1]

    # Row tile: multiple of 128, and keep >= 2 tiles when N allows so both
    # v7x TensorCores get work via the "parallel" grid axis.
    half = _round_up(max(-(-n // 2), 1), LANE)
    rt = max(LANE, min(_round_up(row_tile, LANE), half))
    n_p = _round_up(n, rt)
    n_tiles = n_p // rt

    # Only row padding (feature dim untouched, no dtype cast in the wrapper).
    x_p = x if n_p == n else jnp.pad(x, ((0, n_p - n), (0, 0)))

    r = rt // LANE
    in_specs = [
        pl.BlockSpec((rt, d_in), lambda i: (i, 0)),         # x rows
        pl.BlockSpec(w1p.shape, lambda i: (0, 0)),          # grid-invariant
        pl.BlockSpec(b1p.shape, lambda i: (0, 0)),
        pl.BlockSpec(w2p.shape, lambda i: (0, 0)),
        pl.BlockSpec(b2p.shape, lambda i: (0, 0)),
        pl.BlockSpec(w3p.shape, lambda i: (0, 0)),
        pl.BlockSpec(b3p.shape, lambda i: (0, 0)),
    ]
    out_spec = pl.BlockSpec((1, r, LANE), lambda i: (i, 0, 0))

    # Real traffic / flops (recomputed after removing the padding).
    flops = n_p * (2 * d_in * hid_p + 2 * hid_p * hid_p + 2 * hid_p)
    bytes_accessed = (x_p.size * x_p.dtype.itemsize
                      + n_p * 4
                      + sum(a.size * a.dtype.itemsize for a in packed))

    out3d = pl.pallas_call(
        _scoring_kernel,
        out_shape=jax.ShapeDtypeStruct((n_tiles, r, LANE), jnp.float32),
        grid_spec=pltpu.PrefetchScalarGridSpec(
            num_scalar_prefetch=0,
            grid=(n_tiles,),
            in_specs=in_specs,
            out_specs=out_spec,
        ),
        compiler_params=pltpu.CompilerParams(
            dimension_semantics=("parallel",)),
        cost_estimate=pl.CostEstimate(flops=int(flops),
                                      transcendentals=0,
                                      bytes_accessed=int(bytes_accessed)),
    )(x_p, w1p, b1p, w2p, b2p, w3p, b3p)

    # Packed scores -> [N, 1]. Row-major flatten of (n_tiles, r, 128) gives
    # global row i*rt + t*128 + j, matching the in-kernel layout; reshape of a
    # contiguous array is free.
    return out3d.reshape(n_p)[:n].reshape(n, 1)


def init_params(key, input_dims, hidden_dims, num_layers=NUM_LAYERS):
    """Synthetic nn.Linear params (PyTorch layout: W [out, in], b [out])."""
    dims = [input_dims] + [hidden_dims] * (num_layers - 1) + [1]
    params = []
    for i in range(num_layers):
        fan_in, fan_out = dims[i], dims[i + 1]
        bound = 1.0 / float(fan_in) ** 0.5
        key, kw, kb = jax.random.split(key, 3)
        w = jax.random.uniform(kw, (fan_out, fan_in), jnp.float32, -bound, bound)
        b = jax.random.uniform(kb, (fan_out,), jnp.float32, -bound, bound)
        params.append((w, b))
    return params


def scoring_func_reference(x, params):
    """Pure-JAX f32 reference of the PyTorch forward pass."""
    h = x
    for li, (w, b) in enumerate(params):
        h = h @ w.T + b
        if li != len(params) - 1:
            h = jnp.maximum(h, 0.0)
    return h


if __name__ == "__main__":
    key = jax.random.PRNGKey(0)
    batch, input_dims, hidden_dims = 512, 2, 128   # -> 2 row tiles of 256

    key, kx = jax.random.split(key)
    x = jax.random.normal(kx, (batch, input_dims), jnp.float32)
    params = init_params(key, input_dims, hidden_dims)
    packed = pack_params(params)

    out = scoring_func_forward(x, packed, row_tile=1024)
    out = jax.block_until_ready(out)

    ref = scoring_func_reference(x, params)
    assert out.shape == (batch, 1)
    # Only layer 2 round-trips through bf16 now (layers 1 and 3 are f32 VPU).
    max_err = float(jnp.max(jnp.abs(out - ref)))
    assert max_err < 5e-2, f"mismatch vs reference: max_err={max_err}"

    print("KERNEL_OK")
</pallas_src>

<mosaic_0001>
module attributes {stable_mosaic.version = 11 : i64} {
  func.func @_scoring_kernel(%arg0: i32, %arg1: memref<256x2xf32, #tpu.memory_space<vmem>>, %arg2: memref<2x128xf32, #tpu.memory_space<vmem>>, %arg3: memref<1x128xf32, #tpu.memory_space<vmem>>, %arg4: memref<128x128xbf16, #tpu.memory_space<vmem>>, %arg5: memref<1x128xf32, #tpu.memory_space<vmem>>, %arg6: memref<1x128xf32, #tpu.memory_space<vmem>>, %arg7: memref<1x1xf32, #tpu.memory_space<vmem>>, %arg8: memref<1x2x128xf32, #tpu.memory_space<vmem>>) attributes {dimension_semantics = [#tpu.dimension_semantics<parallel>], iteration_bounds = array<i64: 2>, scalar_prefetch = 0 : i64, scratch_operands = 0 : i64, tpu.core_type = #tpu.core_type<tc>, window_params = [{transform_indices = @transform_0, window_bounds = array<i64: 256, 2>}, {pipeline_mode = #tpu.pipeline_mode<synchronous>, transform_indices = @transform_1, window_bounds = array<i64: 2, 128>}, {pipeline_mode = #tpu.pipeline_mode<synchronous>, transform_indices = @transform_2, window_bounds = array<i64: 1, 128>}, {pipeline_mode = #tpu.pipeline_mode<synchronous>, transform_indices = @transform_3, window_bounds = array<i64: 128, 128>}, {pipeline_mode = #tpu.pipeline_mode<synchronous>, transform_indices = @transform_4, window_bounds = array<i64: 1, 128>}, {pipeline_mode = #tpu.pipeline_mode<synchronous>, transform_indices = @transform_5, window_bounds = array<i64: 1, 128>}, {pipeline_mode = #tpu.pipeline_mode<synchronous>, transform_indices = @transform_6, window_bounds = array<i64: 1, 1>}, {transform_indices = @transform_7, window_bounds = array<i64: 1, 2, 128>}]} {
    %c0 = arith.constant 0 : index
    %c0_0 = arith.constant 0 : index
    %0 = vector.load %arg1[%c0, %c0_0] : memref<256x2xf32, #tpu.memory_space<vmem>>, vector<256x2xf32>
    %1 = vector.extract_strided_slice %0 {offsets = [0, 0], sizes = [256, 1], strides = [1, 1]} : vector<256x2xf32> to vector<256x1xf32>
    %c0_1 = arith.constant 0 : index
    %c0_2 = arith.constant 0 : index
    %2 = vector.load %arg2[%c0_1, %c0_2] : memref<2x128xf32, #tpu.memory_space<vmem>>, vector<1x128xf32>
    %3 = vector.broadcast %1 : vector<256x1xf32> to vector<256x128xf32>
    %4 = vector.broadcast %2 : vector<1x128xf32> to vector<256x128xf32>
    %5 = arith.mulf %3, %4 : vector<256x128xf32>
    %6 = vector.extract_strided_slice %0 {offsets = [0, 1], sizes = [256, 1], strides = [1, 1]} : vector<256x2xf32> to vector<256x1xf32>
    %c1 = arith.constant 1 : index
    %c0_3 = arith.constant 0 : index
    %7 = vector.load %arg2[%c1, %c0_3] : memref<2x128xf32, #tpu.memory_space<vmem>>, vector<1x128xf32>
    %8 = vector.broadcast %6 : vector<256x1xf32> to vector<256x128xf32>
    %9 = vector.broadcast %7 : vector<1x128xf32> to vector<256x128xf32>
    %10 = arith.mulf %8, %9 : vector<256x128xf32>
    %11 = arith.addf %5, %10 : vector<256x128xf32>
    %c0_4 = arith.constant 0 : index
    %c0_5 = arith.constant 0 : index
    %12 = vector.load %arg3[%c0_4, %c0_5] : memref<1x128xf32, #tpu.memory_space<vmem>>, vector<1x128xf32>
    %13 = vector.broadcast %12 : vector<1x128xf32> to vector<256x128xf32>
    %14 = arith.addf %11, %13 : vector<256x128xf32>
    %cst = arith.constant 0.000000e+00 : f32
    %15 = vector.broadcast %cst : f32 to vector<256x128xf32>
    %16 = arith.maximumf %14, %15 : vector<256x128xf32>
    %17 = arith.truncf %16 : vector<256x128xf32> to vector<256x128xbf16>
    %c0_6 = arith.constant 0 : index
    %c0_7 = arith.constant 0 : index
    %18 = vector.load %arg4[%c0_6, %c0_7] : memref<128x128xbf16, #tpu.memory_space<vmem>>, vector<128x128xbf16>
    %cst_8 = arith.constant dense<0.000000e+00> : vector<256x128xf32>
    %19 = tpu.matmul %17, %18, %cst_8 {dimension_numbers = #tpu.dot_dimension_numbers<[1], [0], [0], [1], [0, 0, 1, 1], [], []>} : vector<256x128xbf16>, vector<128x128xbf16>, vector<256x128xf32> -> vector<256x128xf32>
    %c0_9 = arith.constant 0 : index
    %c0_10 = arith.constant 0 : index
    %20 = vector.load %arg5[%c0_9, %c0_10] : memref<1x128xf32, #tpu.memory_space<vmem>>, vector<1x128xf32>
    %21 = vector.broadcast %20 : vector<1x128xf32> to vector<256x128xf32>
    %22 = arith.addf %19, %21 : vector<256x128xf32>
    %cst_11 = arith.constant 0.000000e+00 : f32
    %23 = vector.broadcast %cst_11 : f32 to vector<256x128xf32>
    %24 = arith.maximumf %22, %23 : vector<256x128xf32>
    %c0_12 = arith.constant 0 : index
    %c0_13 = arith.constant 0 : index
    %25 = vector.load %arg6[%c0_12, %c0_13] : memref<1x128xf32, #tpu.memory_space<vmem>>, vector<1x128xf32>
    %26 = vector.broadcast %25 : vector<1x128xf32> to vector<256x128xf32>
    %27 = arith.mulf %24, %26 : vector<256x128xf32>
    %28 = vector.shape_cast %27 : vector<256x128xf32> to vector<2x128x128xf32>
    %cst_14 = arith.constant dense<0.000000e+00> : vector<2x128xf32>
    %29 = vector.multi_reduction <add>, %28, %cst_14 [2] : vector<2x128x128xf32> to vector<2x128xf32>
    %c0_15 = arith.constant 0 : index
    %c0_16 = arith.constant 0 : index
    %30 = vector.load %arg7[%c0_15, %c0_16] : memref<1x1xf32, #tpu.memory_space<vmem>>, vector<1x1xf32>
    %31 = vector.broadcast %30 : vector<1x1xf32> to vector<2x128xf32>
    %32 = arith.addf %29, %31 : vector<2x128xf32>
    %33 = vector.shape_cast %32 : vector<2x128xf32> to vector<1x2x128xf32>
    %c0_17 = arith.constant 0 : index
    %c0_18 = arith.constant 0 : index
    %c0_19 = arith.constant 0 : index
    %34 = vector.load %arg8[%c0_17, %c0_18, %c0_19] : memref<1x2x128xf32, #tpu.memory_space<vmem>>, vector<1x2x128xf32>
    tpu.vector_store %arg8[%c0_17, %c0_18, %c0_19], %33 {strides = array<i32>} : memref<1x2x128xf32, #tpu.memory_space<vmem>>, vector<1x2x128xf32>,
    return
  }
  func.func @transform_0(%arg0: i32) -> (i32, i32) {
    %c0_i32 = arith.constant 0 : i32
    %c0_i32_0 = arith.constant 0 : i32
    return %arg0, %c0_i32 : i32, i32
  }
  func.func @transform_1(%arg0: i32) -> (i32, i32) {
    %c0_i32 = arith.constant 0 : i32
    %c0_i32_0 = arith.constant 0 : i32
    %c0_i32_1 = arith.constant 0 : i32
    return %c0_i32, %c0_i32_0 : i32, i32
  }
  func.func @transform_2(%arg0: i32) -> (i32, i32) {
    %c0_i32 = arith.constant 0 : i32
    %c0_i32_0 = arith.constant 0 : i32
    %c0_i32_1 = arith.constant 0 : i32
    return %c0_i32, %c0_i32_0 : i32, i32
  }
  func.func @transform_3(%arg0: i32) -> (i32, i32) {
    %c0_i32 = arith.constant 0 : i32
    %c0_i32_0 = arith.constant 0 : i32
    %c0_i32_1 = arith.constant 0 : i32
    return %c0_i32, %c0_i32_0 : i32, i32
  }
  func.func @transform_4(%arg0: i32) -> (i32, i32) {
    %c0_i32 = arith.constant 0 : i32
    %c0_i32_0 = arith.constant 0 : i32
    %c0_i32_1 = arith.constant 0 : i32
    return %c0_i32, %c0_i32_0 : i32, i32
  }
  func.func @transform_5(%arg0: i32) -> (i32, i32) {
    %c0_i32 = arith.constant 0 : i32
    %c0_i32_0 = arith.constant 0 : i32
    %c0_i32_1 = arith.constant 0 : i32
    return %c0_i32, %c0_i32_0 : i32, i32
  }
  func.func @transform_6(%arg0: i32) -> (i32, i32) {
    %c0_i32 = arith.constant 0 : i32
    %c0_i32_0 = arith.constant 0 : i32
    %c0_i32_1 = arith.constant 0 : i32
    return %c0_i32, %c0_i32_0 : i32, i32
  }
  func.func @transform_7(%arg0: i32) -> (i32, i32, i32) {
    %c0_i32 = arith.constant 0 : i32
    %c0_i32_0 = arith.constant 0 : i32
    %c0_i32_1 = arith.constant 0 : i32
    return %arg0, %c0_i32, %c0_i32_0 : i32, i32, i32
  }
}

</mosaic_0001>

<llo_original>
// kernel: tpu_custom_call.1
$region0: #{tpu_custom_call.1}
  #allocation0 [shape = 'u32[]', space=smem, size = 0x4, offset = 0x4, fixed_abs, tag = 'smem constant byte address 0x4 - core index']
  #allocation1 [shape = 'u32[144,128]{1,0:T(1,128)}', space=vmem, size = 0x12000, scoped, tag = 'internal scratch']
  #allocation2 [shape = 'f32[1,1]{1,0:T(1,128)S(1)}', space=vmem, size = 0x200, scoped, tag = 'scoped memory for tpu_custom_call.1']
  %s0 = inlined_call_operand.vmem [shape: f32[512,2], index: 0, kind: input, shape index: {}]
  %s1 = inlined_call_operand.vmem [shape: f32[2,128], index: 1, kind: input, shape index: {}]
  %s2 = inlined_call_operand.vmem [shape: f32[1,128], index: 2, kind: input, shape index: {}]
  %s3 = inlined_call_operand.vmem [shape: bf16[128,128], index: 3, kind: input, shape index: {}]
  %s4 = inlined_call_operand.vmem [shape: f32[1,128], index: 4, kind: input, shape index: {}]
  %s5 = inlined_call_operand.vmem [shape: f32[1,128], index: 5, kind: input, shape index: {}]
  %s6 = inlined_call_operand.<no memory space> [shape: f32[1,1], index: 6, kind: input, shape index: {}]
  %s7 = inlined_call_operand.hbm [shape: f32[2,2,128], index: 7, kind: output, shape index: {}]
  %s8 = sld [smem:[#allocation0]]
  $region61: #{tpu_custom_call.1} parent=0
    _
  %s10 = ssub.s32 1, %s8
  %s11 = scalar_select 0, %s10, %s8
  %v12 = vstv %s6
  %13 = vst [vmem:[#allocation2] sm:$0x1] %v12
  $region1: #{tpu_custom_call.1} parent=0
    #allocation3 [shape = 'u8[2048]{0}', space=vmem, size = 0x800, scoped, tag = 'output window, operand 0']
    #allocation4 [shape = 's32[2]{0}', space=sflag, size = 0x8, scoped, tag = 'scoped memory for tpu_custom_call.1']
    %14 = vsyncpa [#allocation4], 0
    %s15 = scalar_lea.sflag [#allocation4], 1
    %16 = vsyncpa %s15, 0
    loop: start=0, step=1, limit=4
    $region2: #{tpu_custom_call.1} parent=1 // loop_pre_header
      _
    $region3: #{tpu_custom_call.1} parent=1 // loop_header
      %s18 = sphi 0, %s22
      %p19 = scmp.ge.s32.totalorder %s18, 4
      %s28 = sphi 0, %s30
      %s31 = sphi 0, %s28
      %s32 = sphi 0, %s31
      %s48 = sphi 0, %s32
      %s52 = sphi 0, %s52
      %s54 = sphi 0, %s52
      %s55 = sphi 0, %s54
      %s69 = sphi 0, %s55
      %s73 = sphi 0, %s73
      %s75 = sphi 0, %s73
      %s76 = sphi 0, %s75
      %s90 = sphi 0, %s76
      %s94 = sphi 0, %s94
      %s96 = sphi 0, %s94
      %s97 = sphi 0, %s96
      %s111 = sphi 0, %s97
      %s115 = sphi 0, %s115
      %s117 = sphi 0, %s115
      %s118 = sphi 0, %s117
      %s132 = sphi 0, %s118
      %s136 = sphi 0, %s136
      %s138 = sphi 0, %s136
      %s139 = sphi 0, %s138
      %s153 = sphi 0, %s139
      %s157 = sphi 0, %s157
      %s159 = sphi 0, %s157
      %s160 = sphi 0, %s159
      %s174 = sphi 0, %s160
      %s180 = sphi 0, %s182
      %s183 = sphi 0, %s180
      %s184 = sphi 0, %s183
      %s200 = sphi 0, %s184
    $region4: #{tpu_custom_call.1} parent=1 // loop_header_branch
      %21 = sbr.rel (%p19) target = $region8
    $region5: #{tpu_custom_call.1} parent=1 // loop_body
      %s23 = ssub.s32 %s18, 1
      %s24 = ssub.s32 %s18, 2
      %s25 = sadd.s32 %s18, 1
      %s26 = ssub.s32 %s18, %s25
      %p27 = scmp.eq.s32.totalorder %s26, 0
      %s29 = sadd.s32 %s28, 1
      %s30 = scalar_select %p27, %s28, %s29
      %p33 = pneg %p27
      %p34 = scmp.eq.s32.totalorder %s18, 1
      %p35 = por %p33, %p34
      %p36 = scmp.ne.s32.totalorder %s28, %s31
      %p37 = scmp.eq.s32.totalorder %s18, 0
      %p38 = por %p36, %p37
      %p39 = scmp.ne.s32.totalorder %s28, %s31
      %p40 = scmp.eq.s32.totalorder %s23, 1
      %p41 = por %p39, %p40
      %p42 = scmp.ne.s32.totalorder %s31, %s32
      %p43 = scmp.eq.s32.totalorder %s23, 0
      %p44 = por %p42, %p43
      %p45 = scmp.ne.s32.totalorder %s31, %s32
      %p46 = scmp.eq.s32.totalorder %s24, 1
      %p47 = por %p45, %p46
      %p49 = scmp.ne.s32.totalorder %s32, %s48
      %p50 = scmp.eq.s32.totalorder %s24, 0
      %p51 = por %p49, %p50
      %s53 = sadd.s32 %s52, 1
      %p56 = scmp.eq.s32.totalorder %s18, 1
      %p57 = scmp.ne.s32.totalorder %s52, %s54
      %p58 = scmp.eq.s32.totalorder %s18, 0
      %p59 = por %p57, %p58
      %p60 = scmp.ne.s32.totalorder %s52, %s54
      %p61 = scmp.eq.s32.totalorder %s23, 1
      %p62 = por %p60, %p61
      %p63 = scmp.ne.s32.totalorder %s54, %s55
      %p64 = scmp.eq.s32.totalorder %s23, 0
      %p65 = por %p63, %p64
      %p66 = scmp.ne.s32.totalorder %s54, %s55
      %p67 = scmp.eq.s32.totalorder %s24, 1
      %p68 = por %p66, %p67
      %p70 = scmp.ne.s32.totalorder %s55, %s69
      %p71 = scmp.eq.s32.totalorder %s24, 0
      %p72 = por %p70, %p71
      %s74 = sadd.s32 %s73, 1
      %p77 = scmp.eq.s32.totalorder %s18, 1
      %p78 = scmp.ne.s32.totalorder %s73, %s75
      %p79 = scmp.eq.s32.totalorder %s18, 0
      %p80 = por %p78, %p79
      %p81 = scmp.ne.s32.totalorder %s73, %s75
      %p82 = scmp.eq.s32.totalorder %s23, 1
      %p83 = por %p81, %p82
      %p84 = scmp.ne.s32.totalorder %s75, %s76
      %p85 = scmp.eq.s32.totalorder %s23, 0
      %p86 = por %p84, %p85
      %p87 = scmp.ne.s32.totalorder %s75, %s76
      %p88 = scmp.eq.s32.totalorder %s24, 1
      %p89 = por %p87, %p88
      %p91 = scmp.ne.s32.totalorder %s76, %s90
      %p92 = scmp.eq.s32.totalorder %s24, 0
      %p93 = por %p91, %p92
      %s95 = sadd.s32 %s94, 1
      %p98 = scmp.eq.s32.totalorder %s18, 1
      %p99 = scmp.ne.s32.totalorder %s94, %s96
      %p100 = scmp.eq.s32.totalorder %s18, 0
      %p101 = por %p99, %p100
      %p102 = scmp.ne.s32.totalorder %s94, %s96
      %p103 = scmp.eq.s32.totalorder %s23, 1
      %p104 = por %p102, %p103
      %p105 = scmp.ne.s32.totalorder %s96, %s97
      %p106 = scmp.eq.s32.totalorder %s23, 0
      %p107 = por %p105, %p106
      %p108 = scmp.ne.s32.totalorder %s96, %s97
      %p109 = scmp.eq.s32.totalorder %s24, 1
      %p110 = por %p108, %p109
      %p112 = scmp.ne.s32.totalorder %s97, %s111
      %p113 = scmp.eq.s32.totalorder %s24, 0
      %p114 = por %p112, %p113
      %s116 = sadd.s32 %s115, 1
      %p119 = scmp.eq.s32.totalorder %s18, 1
      %p120 = scmp.ne.s32.totalorder %s115, %s117
      %p121 = scmp.eq.s32.totalorder %s18, 0
      %p122 = por %p120, %p121
      %p123 = scmp.ne.s32.totalorder %s115, %s117
      %p124 = scmp.eq.s32.totalorder %s23, 1
      %p125 = por %p123, %p124
      %p126 = scmp.ne.s32.totalorder %s117, %s118
      %p127 = scmp.eq.s32.totalorder %s23, 0
      %p128 = por %p126, %p127
      %p129 = scmp.ne.s32.totalorder %s117, %s118
      %p130 = scmp.eq.s32.totalorder %s24, 1
      %p131 = por %p129, %p130
      %p133 = scmp.ne.s32.totalorder %s118, %s132
      %p134 = scmp.eq.s32.totalorder %s24, 0
      %p135 = por %p133, %p134
      %s137 = sadd.s32 %s136, 1
      %p140 = scmp.eq.s32.totalorder %s18, 1
      %p141 = scmp.ne.s32.totalorder %s136, %s138
      %p142 = scmp.eq.s32.totalorder %s18, 0
      %p143 = por %p141, %p142
      %p144 = scmp.ne.s32.totalorder %s136, %s138
      %p145 = scmp.eq.s32.totalorder %s23, 1
      %p146 = por %p144, %p145
      %p147 = scmp.ne.s32.totalorder %s138, %s139
      %p148 = scmp.eq.s32.totalorder %s23, 0
      %p149 = por %p147, %p148
      %p150 = scmp.ne.s32.totalorder %s138, %s139
      %p151 = scmp.eq.s32.totalorder %s24, 1
      %p152 = por %p150, %p151
      %p154 = scmp.ne.s32.totalorder %s139, %s153
      %p155 = scmp.eq.s32.totalorder %s24, 0
      %p156 = por %p154, %p155
      %s158 = sadd.s32 %s157, 1
      %p161 = scmp.eq.s32.totalorder %s18, 1
      %p162 = scmp.ne.s32.totalorder %s157, %s159
      %p163 = scmp.eq.s32.totalorder %s18, 0
      %p164 = por %p162, %p163
      %p165 = scmp.ne.s32.totalorder %s157, %s159
      %p166 = scmp.eq.s32.totalorder %s23, 1
      %p167 = por %p165, %p166
      %p168 = scmp.ne.s32.totalorder %s159, %s160
      %p169 = scmp.eq.s32.totalorder %s23, 0
      %p170 = por %p168, %p169
      %p171 = scmp.ne.s32.totalorder %s159, %s160
      %p172 = scmp.eq.s32.totalorder %s24, 1
      %p173 = por %p171, %p172
      %p175 = scmp.ne.s32.totalorder %s160, %s174
      %p176 = scmp.eq.s32.totalorder %s24, 0
      %p177 = por %p175, %p176
      %s178 = ssub.s32 %s18, %s25
      %p179 = scmp.eq.s32.totalorder %s178, 0
      %s181 = sadd.s32 %s180, 1
      %s182 = scalar_select %p179, %s180, %s181
      %p185 = pneg %p179
      %p186 = scmp.eq.s32.totalorder %s18, 1
      %p187 = por %p185, %p186
      %p188 = scmp.ne.s32.totalorder %s180, %s183
      %p189 = scmp.eq.s32.totalorder %s18, 0
      %p190 = por %p188, %p189
      %p191 = scmp.ne.s32.totalorder %s180, %s183
      %p192 = scmp.eq.s32.totalorder %s23, 1
      %p193 = por %p191, %p192
      %p194 = scmp.ne.s32.totalorder %s183, %s184
      %p195 = scmp.eq.s32.totalorder %s23, 0
      %p196 = por %p194, %p195
      %p197 = scmp.ne.s32.totalorder %s183, %s184
      %p198 = scmp.eq.s32.totalorder %s24, 1
      %p199 = por %p197, %p198
      %p201 = scmp.ne.s32.totalorder %s184, %s200
      %p202 = scmp.eq.s32.totalorder %s24, 0
      %p203 = por %p201, %p202
      %p204 = scmp.le.s32.totalorder 1, %s18
      %p205 = scmp.lt.s32.totalorder %s18, 3
      %p206 = pnand %p204, %p205
      %p207 = pneg %p206
      // Predicated region
      $region9: #{tpu_custom_call.1} parent=5 // pred_check
        _
      $region10: #{tpu_custom_call.1} parent=5 // pred_check_branch
        %209 = sbr.rel (%p206) target = $region12
      $region11: #{tpu_custom_call.1} parent=5 // pred_region
        %s210 = ssub.s32 %s18, 1
        // Predicated region
        $region13: #{tpu_custom_call.1} parent=11 // pred_check
          %p211 = pneg %p65
        $region14: #{tpu_custom_call.1} parent=11 // pred_check_branch
          %213 = sbr.rel (%p211) target = $region16
        $region15: #{tpu_custom_call.1} parent=11 // pred_region
          _
        $region16: #{tpu_custom_call.1} parent=11 // pred_fallthru
          _
        // Predicated region
        $region17: #{tpu_custom_call.1} parent=11 // pred_check
          %p214 = pneg %p86
        $region18: #{tpu_custom_call.1} parent=11 // pred_check_branch
          %216 = sbr.rel (%p214) target = $region20
        $region19: #{tpu_custom_call.1} parent=11 // pred_region
          _
        $region20: #{tpu_custom_call.1} parent=11 // pred_fallthru
          _
        // Predicated region
        $region21: #{tpu_custom_call.1} parent=11 // pred_check
          %p217 = pneg %p107
        $region22: #{tpu_custom_call.1} parent=11 // pred_check_branch
          %219 = sbr.rel (%p217) target = $region24
        $region23: #{tpu_custom_call.1} parent=11 // pred_region
          _
        $region24: #{tpu_custom_call.1} parent=11 // pred_fallthru
          _
        // Predicated region
        $region25: #{tpu_custom_call.1} parent=11 // pred_check
          %p220 = pneg %p128
        $region26: #{tpu_custom_call.1} parent=11 // pred_check_branch
          %222 = sbr.rel (%p220) target = $region28
        $region27: #{tpu_custom_call.1} parent=11 // pred_region
          _
        $region28: #{tpu_custom_call.1} parent=11 // pred_fallthru
          _
        // Predicated region
        $region29: #{tpu_custom_call.1} parent=11 // pred_check
          %p223 = pneg %p149
        $region30: #{tpu_custom_call.1} parent=11 // pred_check_branch
          %225 = sbr.rel (%p223) target = $region32
        $region31: #{tpu_custom_call.1} parent=11 // pred_region
          _
        $region32: #{tpu_custom_call.1} parent=11 // pred_fallthru
          _
        // Predicated region
        $region33: #{tpu_custom_call.1} parent=11 // pred_check
          %p226 = pneg %p170
        $region34: #{tpu_custom_call.1} parent=11 // pred_check_branch
          %228 = sbr.rel (%p226) target = $region36
        $region35: #{tpu_custom_call.1} parent=11 // pred_region
          _
        $region36: #{tpu_custom_call.1} parent=11 // pred_fallthru
          _
      $region12: #{tpu_custom_call.1} parent=5 // pred_fallthru
        _
      %p229 = scmp.lt.s32.totalorder %s18, 2
      // Predicated region
      $region37: #{tpu_custom_call.1} parent=5 // pred_check
        %p230 = pneg %p229
      $region38: #{tpu_custom_call.1} parent=5 // pred_check_branch
        %232 = sbr.rel (%p230) target = $region40
      $region39: #{tpu_custom_call.1} parent=5 // pred_region
        // Predicated region
        $region41: #{tpu_custom_call.1} parent=39 // pred_check
          %p233 = pneg %p38
        $region42: #{tpu_custom_call.1} parent=39 // pred_check_branch
          %235 = sbr.rel (%p233) target = $region44
        $region43: #{tpu_custom_call.1} parent=39 // pred_region
          %s236 = smul.u32 32, %s18
          %p237 = scmp.lt.s32.totalorder %s236, 63
          %s238 = scalar_select %p237, %s236, 63
          %s239 = smul.addr %s238, 8
          %s240 = scalar_lea.vmem %s0, %s239
          %s241 = smul.u32 32, %s18
        $region44: #{tpu_custom_call.1} parent=39 // pred_fallthru
          _
      $region40: #{tpu_custom_call.1} parent=5 // pred_fallthru
        _
      %p242 = scmp.le.s32.totalorder 1, %s18
      %p243 = scmp.lt.s32.totalorder %s18, 3
      %p244 = pnand %p242, %p243
      %p245 = pneg %p244
      // Predicated region
      $region45: #{tpu_custom_call.1} parent=5 // pred_check
        _
      $region46: #{tpu_custom_call.1} parent=5 // pred_check_branch
        %247 = sbr.rel (%p244) target = $region48
      $region47: #{tpu_custom_call.1} parent=5 // pred_region
        %s248 = ssub.s32 %s18, 1
        %s249 = smul.u32 32, %s23
        %p250 = scmp.lt.s32.totalorder %s249, 63
        %s251 = scalar_select %p250, %s249, 63
        %s252 = smul.addr %s251, 8
        %s253 = scalar_lea.vmem %s0, %s252
        %p254 = pneg %p44
        %p255 = pneg %p41
        %p256 = pneg %p65
        %p257 = pneg %p62
        %p258 = pneg %p86
        %p259 = pneg %p83
        %p260 = pneg %p107
        %p261 = pneg %p104
        %p262 = pneg %p128
        %p263 = pneg %p125
        %p264 = pneg %p149
        %p265 = pneg %p146
        %p266 = pneg %p170
        %p267 = pneg %p167
        %p268 = pneg %p196
        %p269 = pneg %p193
        %s270 = sand.u32 %s183, 1
        %s271 = scalar_lea.sflag [#allocation4], %s270
        %s272 = sand.u32 %s183, 1
        %s273 = smul.addr %s272, 2
        %s274 = scalar_lea.vmem [#allocation3], %s273
        %s275 = smul.u32 32, %s23
        %p276 = scmp.lt.s32.totalorder %s275, 63
        %s277 = scalar_select %p276, %s275, 63
        %s278 = smul.addr %s277, 8
        %s279 = scalar_lea.vmem %s0, %s278
        %s280 = smul.u32 32, %s23
        %v282 = vld [vmem:[%s279] sm:$0xff]
        %v283 = vld [vmem:[%s279 + $0x8] sm:$0xff]
        %v284 = vld [vmem:[%s279 + $0x10] sm:$0xff]
        %v285 = vld [vmem:[%s279 + $0x18] sm:$0xff]
        %v286 = vld [vmem:[%s279 + $0x20] sm:$0xff]
        %v287 = vld [vmem:[%s279 + $0x28] sm:$0xff]
        %v288 = vld [vmem:[%s279 + $0x30] sm:$0xff]
        %v289 = vld [vmem:[%s279 + $0x38] sm:$0xff]
        %v290 = vld [vmem:[%s279 + $0x40] sm:$0xff]
        %v291 = vld [vmem:[%s279 + $0x48] sm:$0xff]
        %v292 = vld [vmem:[%s279 + $0x50] sm:$0xff]
        %v293 = vld [vmem:[%s279 + $0x58] sm:$0xff]
        %v294 = vld [vmem:[%s279 + $0x60] sm:$0xff]
        %v295 = vld [vmem:[%s279 + $0x68] sm:$0xff]
        %v296 = vld [vmem:[%s279 + $0x70] sm:$0xff]
        %v297 = vld [vmem:[%s279 + $0x78] sm:$0xff]
        %v298 = vld [vmem:[%s279 + $0x80] sm:$0xff]
        %v299 = vld [vmem:[%s279 + $0x88] sm:$0xff]
        %v300 = vld [vmem:[%s279 + $0x90] sm:$0xff]
        %v301 = vld [vmem:[%s279 + $0x98] sm:$0xff]
        %v302 = vld [vmem:[%s279 + $0xa0] sm:$0xff]
        %v303 = vld [vmem:[%s279 + $0xa8] sm:$0xff]
        %v304 = vld [vmem:[%s279 + $0xb0] sm:$0xff]
        %v305 = vld [vmem:[%s279 + $0xb8] sm:$0xff]
        %v306 = vld [vmem:[%s279 + $0xc0] sm:$0xff]
        %v307 = vld [vmem:[%s279 + $0xc8] sm:$0xff]
        %v308 = vld [vmem:[%s279 + $0xd0] sm:$0xff]
        %v309 = vld [vmem:[%s279 + $0xd8] sm:$0xff]
        %v310 = vld [vmem:[%s279 + $0xe0] sm:$0xff]
        %v311 = vld [vmem:[%s279 + $0xe8] sm:$0xff]
        %v312 = vld [vmem:[%s279 + $0xf0] sm:$0xff]
        %v313 = vld [vmem:[%s279 + $0xf8] sm:$0xff]
        %v314 = vld [vmem:[%s1] sm:$0x1]
        %316 = vset.pattern.permute.xlu0 0
        %317 = vperm.xlu0 %316, %v282
        %v318 = vpop.permute.xlu0 %317
        %321 = vset.pattern.permute.xlu0 0
        %322 = vperm.xlu0 %321, %v283
        %v323 = vpop.permute.xlu0 %322
        %326 = vset.pattern.permute.xlu0 0
        %327 = vperm.xlu0 %326, %v284
        %v328 = vpop.permute.xlu0 %327
        %331 = vset.pattern.permute.xlu0 0
        %332 = vperm.xlu0 %331, %v285
        %v333 = vpop.permute.xlu0 %332
        %336 = vset.pattern.permute.xlu0 0
        %337 = vperm.xlu0 %336, %v286
        %v338 = vpop.permute.xlu0 %337
        %341 = vset.pattern.permute.xlu0 0
        %342 = vperm.xlu0 %341, %v287
        %v343 = vpop.permute.xlu0 %342
        %346 = vset.pattern.permute.xlu0 0
        %347 = vperm.xlu0 %346, %v288
        %v348 = vpop.permute.xlu0 %347
        %351 = vset.pattern.permute.xlu0 0
        %352 = vperm.xlu0 %351, %v289
        %v353 = vpop.permute.xlu0 %352
        %356 = vset.pattern.permute.xlu0 0
        %357 = vperm.xlu0 %356, %v290
        %v358 = vpop.permute.xlu0 %357
        %361 = vset.pattern.permute.xlu0 0
        %362 = vperm.xlu0 %361, %v291
        %v363 = vpop.permute.xlu0 %362
        %366 = vset.pattern.permute.xlu0 0
        %367 = vperm.xlu0 %366, %v292
        %v368 = vpop.permute.xlu0 %367
        %371 = vset.pattern.permute.xlu0 0
        %372 = vperm.xlu0 %371, %v293
        %v373 = vpop.permute.xlu0 %372
        %376 = vset.pattern.permute.xlu0 0
        %377 = vperm.xlu0 %376, %v294
        %v378 = vpop.permute.xlu0 %377
        %381 = vset.pattern.permute.xlu0 0
        %382 = vperm.xlu0 %381, %v295
        %v383 = vpop.permute.xlu0 %382
        %386 = vset.pattern.permute.xlu0 0
        %387 = vperm.xlu0 %386, %v296
        %v388 = vpop.permute.xlu0 %387
        %391 = vset.pattern.permute.xlu0 0
        %392 = vperm.xlu0 %391, %v297
        %v393 = vpop.permute.xlu0 %392
        %396 = vset.pattern.permute.xlu0 0
        %397 = vperm.xlu0 %396, %v298
        %v398 = vpop.permute.xlu0 %397
        %401 = vset.pattern.permute.xlu0 0
        %402 = vperm.xlu0 %401, %v299
        %v403 = vpop.permute.xlu0 %402
        %406 = vset.pattern.permute.xlu0 0
        %407 = vperm.xlu0 %406, %v300
        %v408 = vpop.permute.xlu0 %407
        %411 = vset.pattern.permute.xlu0 0
        %412 = vperm.xlu0 %411, %v301
        %v413 = vpop.permute.xlu0 %412
        %416 = vset.pattern.permute.xlu0 0
        %417 = vperm.xlu0 %416, %v302
        %v418 = vpop.permute.xlu0 %417
        %421 = vset.pattern.permute.xlu0 0
        %422 = vperm.xlu0 %421, %v303
        %v423 = vpop.permute.xlu0 %422
        %426 = vset.pattern.permute.xlu0 0
        %427 = vperm.xlu0 %426, %v304
        %v428 = vpop.permute.xlu0 %427
        %431 = vset.pattern.permute.xlu0 0
        %432 = vperm.xlu0 %431, %v305
        %v433 = vpop.permute.xlu0 %432
        %436 = vset.pattern.permute.xlu0 0
        %437 = vperm.xlu0 %436, %v306
        %v438 = vpop.permute.xlu0 %437
        %441 = vset.pattern.permute.xlu0 0
        %442 = vperm.xlu0 %441, %v307
        %v443 = vpop.permute.xlu0 %442
        %446 = vset.pattern.permute.xlu0 0
        %447 = vperm.xlu0 %446, %v308
        %v448 = vpop.permute.xlu0 %447
        %451 = vset.pattern.permute.xlu0 0
        %452 = vperm.xlu0 %451, %v309
        %v453 = vpop.permute.xlu0 %452
        %456 = vset.pattern.permute.xlu0 0
        %457 = vperm.xlu0 %456, %v310
        %v458 = vpop.permute.xlu0 %457
        %461 = vset.pattern.permute.xlu0 0
        %462 = vperm.xlu0 %461, %v311
        %v463 = vpop.permute.xlu0 %462
        %466 = vset.pattern.permute.xlu0 0
        %467 = vperm.xlu0 %466, %v312
        %v468 = vpop.permute.xlu0 %467
        %471 = vset.pattern.permute.xlu0 0
        %472 = vperm.xlu0 %471, %v313
        %v473 = vpop.permute.xlu0 %472
        %v475 = vlaneseq
        %v476 = vshrl.u32 %v475, 7
        %v477 = vsub.s32 0, %v476
        %v478 = vrot.slane %v314, %v477
        %v479 = vmul.f32 %v318, %v478
        %v480 = vmul.f32 %v323, %v478
        %v481 = vmul.f32 %v328, %v478
        %v482 = vmul.f32 %v333, %v478
        %v483 = vmul.f32 %v338, %v478
        %v484 = vmul.f32 %v343, %v478
        %v485 = vmul.f32 %v348, %v478
        %v486 = vmul.f32 %v353, %v478
        %v487 = vmul.f32 %v358, %v478
        %v488 = vmul.f32 %v363, %v478
        %v489 = vmul.f32 %v368, %v478
        %v490 = vmul.f32 %v373, %v478
        %v491 = vmul.f32 %v378, %v478
        %v492 = vmul.f32 %v383, %v478
        %v493 = vmul.f32 %v388, %v478
        %v494 = vmul.f32 %v393, %v478
        %v495 = vmul.f32 %v398, %v478
        %v496 = vmul.f32 %v403, %v478
        %v497 = vmul.f32 %v408, %v478
        %v498 = vmul.f32 %v413, %v478
        %v499 = vmul.f32 %v418, %v478
        %v500 = vmul.f32 %v423, %v478
        %v501 = vmul.f32 %v428, %v478
        %v502 = vmul.f32 %v433, %v478
        %v503 = vmul.f32 %v438, %v478
        %v504 = vmul.f32 %v443, %v478
        %v505 = vmul.f32 %v448, %v478
        %v506 = vmul.f32 %v453, %v478
        %v507 = vmul.f32 %v458, %v478
        %v508 = vmul.f32 %v463, %v478
        %v509 = vmul.f32 %v468, %v478
        %v510 = vmul.f32 %v473, %v478
        %v511 = vld [vmem:[%s1 + $0x1] sm:$0x1]
        %512 = vset.pattern.permute.xlu0 1
        %513 = vperm.xlu0 %512, %v282
        %v514 = vpop.permute.xlu0 %513
        %516 = vset.pattern.permute.xlu0 1
        %517 = vperm.xlu0 %516, %v283
        %v518 = vpop.permute.xlu0 %517
        %520 = vset.pattern.permute.xlu0 1
        %521 = vperm.xlu0 %520, %v284
        %v522 = vpop.permute.xlu0 %521
        %524 = vset.pattern.permute.xlu0 1
        %525 = vperm.xlu0 %524, %v285
        %v526 = vpop.permute.xlu0 %525
        %528 = vset.pattern.permute.xlu0 1
        %529 = vperm.xlu0 %528, %v286
        %v530 = vpop.permute.xlu0 %529
        %532 = vset.pattern.permute.xlu0 1
        %533 = vperm.xlu0 %532, %v287
        %v534 = vpop.permute.xlu0 %533
        %536 = vset.pattern.permute.xlu0 1
        %537 = vperm.xlu0 %536, %v288
        %v538 = vpop.permute.xlu0 %537
        %540 = vset.pattern.permute.xlu0 1
        %541 = vperm.xlu0 %540, %v289
        %v542 = vpop.permute.xlu0 %541
        %544 = vset.pattern.permute.xlu0 1
        %545 = vperm.xlu0 %544, %v290
        %v546 = vpop.permute.xlu0 %545
        %548 = vset.pattern.permute.xlu0 1
        %549 = vperm.xlu0 %548, %v291
        %v550 = vpop.permute.xlu0 %549
        %552 = vset.pattern.permute.xlu0 1
        %553 = vperm.xlu0 %552, %v292
        %v554 = vpop.permute.xlu0 %553
        %556 = vset.pattern.permute.xlu0 1
        %557 = vperm.xlu0 %556, %v293
        %v558 = vpop.permute.xlu0 %557
        %560 = vset.pattern.permute.xlu0 1
        %561 = vperm.xlu0 %560, %v294
        %v562 = vpop.permute.xlu0 %561
        %564 = vset.pattern.permute.xlu0 1
        %565 = vperm.xlu0 %564, %v295
        %v566 = vpop.permute.xlu0 %565
        %568 = vset.pattern.permute.xlu0 1
        %569 = vperm.xlu0 %568, %v296
        %v570 = vpop.permute.xlu0 %569
        %572 = vset.pattern.permute.xlu0 1
        %573 = vperm.xlu0 %572, %v297
        %v574 = vpop.permute.xlu0 %573
        %576 = vset.pattern.permute.xlu0 1
        %577 = vperm.xlu0 %576, %v298
        %v578 = vpop.permute.xlu0 %577
        %580 = vset.pattern.permute.xlu0 1
        %581 = vperm.xlu0 %580, %v299
        %v582 = vpop.permute.xlu0 %581
        %584 = vset.pattern.permute.xlu0 1
        %585 = vperm.xlu0 %584, %v300
        %v586 = vpop.permute.xlu0 %585
        %588 = vset.pattern.permute.xlu0 1
        %589 = vperm.xlu0 %588, %v301
        %v590 = vpop.permute.xlu0 %589
        %592 = vset.pattern.permute.xlu0 1
        %593 = vperm.xlu0 %592, %v302
        %v594 = vpop.permute.xlu0 %593
        %596 = vset.pattern.permute.xlu0 1
        %597 = vperm.xlu0 %596, %v303
        %v598 = vpop.permute.xlu0 %597
        %600 = vset.pattern.permute.xlu0 1
        %601 = vperm.xlu0 %600, %v304
        %v602 = vpop.permute.xlu0 %601
        %604 = vset.pattern.permute.xlu0 1
        %605 = vperm.xlu0 %604, %v305
        %v606 = vpop.permute.xlu0 %605
        %608 = vset.pattern.permute.xlu0 1
        %609 = vperm.xlu0 %608, %v306
        %v610 = vpop.permute.xlu0 %609
        %612 = vset.pattern.permute.xlu0 1
        %613 = vperm.xlu0 %612, %v307
        %v614 = vpop.permute.xlu0 %613
        %616 = vset.pattern.permute.xlu0 1
        %617 = vperm.xlu0 %616, %v308
        %v618 = vpop.permute.xlu0 %617
        %620 = vset.pattern.permute.xlu0 1
        %621 = vperm.xlu0 %620, %v309
        %v622 = vpop.permute.xlu0 %621
        %624 = vset.pattern.permute.xlu0 1
        %625 = vperm.xlu0 %624, %v310
        %v626 = vpop.permute.xlu0 %625
        %628 = vset.pattern.permute.xlu0 1
        %629 = vperm.xlu0 %628, %v311
        %v630 = vpop.permute.xlu0 %629
        %632 = vset.pattern.permute.xlu0 1
        %633 = vperm.xlu0 %632, %v312
        %v634 = vpop.permute.xlu0 %633
        %636 = vset.pattern.permute.xlu0 1
        %637 = vperm.xlu0 %636, %v313
        %v638 = vpop.permute.xlu0 %637
        %v640 = vlaneseq
        %v641 = vshrl.u32 %v640, 7
        %v642 = vsub.s32 0, %v641
        %v643 = vrot.slane %v511, %v642
        %v644 = vmul.f32 %v514, %v643
        %v645 = vmul.f32 %v518, %v643
        %v646 = vmul.f32 %v522, %v643
        %v647 = vmul.f32 %v526, %v643
        %v648 = vmul.f32 %v530, %v643
        %v649 = vmul.f32 %v534, %v643
        %v650 = vmul.f32 %v538, %v643
        %v651 = vmul.f32 %v542, %v643
        %v652 = vmul.f32 %v546, %v643
        %v653 = vmul.f32 %v550, %v643
        %v654 = vmul.f32 %v554, %v643
        %v655 = vmul.f32 %v558, %v643
        %v656 = vmul.f32 %v562, %v643
        %v657 = vmul.f32 %v566, %v643
        %v658 = vmul.f32 %v570, %v643
        %v659 = vmul.f32 %v574, %v643
        %v660 = vmul.f32 %v578, %v643
        %v661 = vmul.f32 %v582, %v643
        %v662 = vmul.f32 %v586, %v643
        %v663 = vmul.f32 %v590, %v643
        %v664 = vmul.f32 %v594, %v643
        %v665 = vmul.f32 %v598, %v643
        %v666 = vmul.f32 %v602, %v643
        %v667 = vmul.f32 %v606, %v643
        %v668 = vmul.f32 %v610, %v643
        %v669 = vmul.f32 %v614, %v643
        %v670 = vmul.f32 %v618, %v643
        %v671 = vmul.f32 %v622, %v643
        %v672 = vmul.f32 %v626, %v643
        %v673 = vmul.f32 %v630, %v643
        %v674 = vmul.f32 %v634, %v643
        %v675 = vmul.f32 %v638, %v643
        %v676 = vadd.f32 %v479, %v644
        %v677 = vadd.f32 %v480, %v645
        %v678 = vadd.f32 %v481, %v646
        %v679 = vadd.f32 %v482, %v647
        %v680 = vadd.f32 %v483, %v648
        %v681 = vadd.f32 %v484, %v649
        %v682 = vadd.f32 %v485, %v650
        %v683 = vadd.f32 %v486, %v651
        %v684 = vadd.f32 %v487, %v652
        %v685 = vadd.f32 %v488, %v653
        %v686 = vadd.f32 %v489, %v654
        %v687 = vadd.f32 %v490, %v655
        %v688 = vadd.f32 %v491, %v656
        %v689 = vadd.f32 %v492, %v657
        %v690 = vadd.f32 %v493, %v658
        %v691 = vadd.f32 %v494, %v659
        %v692 = vadd.f32 %v495, %v660
        %v693 = vadd.f32 %v496, %v661
        %v694 = vadd.f32 %v497, %v662
        %v695 = vadd.f32 %v498, %v663
        %v696 = vadd.f32 %v499, %v664
        %v697 = vadd.f32 %v500, %v665
        %v698 = vadd.f32 %v501, %v666
        %v699 = vadd.f32 %v502, %v667
        %v700 = vadd.f32 %v503, %v668
        %v701 = vadd.f32 %v504, %v669
        %v702 = vadd.f32 %v505, %v670
        %v703 = vadd.f32 %v506, %v671
        %v704 = vadd.f32 %v507, %v672
        %v705 = vadd.f32 %v508, %v673
        %v706 = vadd.f32 %v509, %v674
        %v707 = vadd.f32 %v510, %v675
        %v708 = vld [vmem:[%s2] sm:$0x1]
        %v710 = vlaneseq
        %v711 = vshrl.u32 %v710, 7
        %v712 = vsub.s32 0, %v711
        %v713 = vrot.slane %v708, %v712
        %v715 = vadd.f32 %v676, %v713
        %v716 = vadd.f32 %v677, %v713
        %v717 = vadd.f32 %v678, %v713
        %v718 = vadd.f32 %v679, %v713
        %v719 = vadd.f32 %v680, %v713
        %v720 = vadd.f32 %v681, %v713
        %v721 = vadd.f32 %v682, %v713
        %v722 = vadd.f32 %v683, %v713
        %v723 = vadd.f32 %v684, %v713
        %v724 = vadd.f32 %v685, %v713
        %v725 = vadd.f32 %v686, %v713
        %v726 = vadd.f32 %v687, %v713
        %v727 = vadd.f32 %v688, %v713
        %v728 = vadd.f32 %v689, %v713
        %v729 = vadd.f32 %v690, %v713
        %v730 = vadd.f32 %v691, %v713
        %v731 = vadd.f32 %v692, %v713
        %v732 = vadd.f32 %v693, %v713
        %v733 = vadd.f32 %v694, %v713
        %v734 = vadd.f32 %v695, %v713
        %v735 = vadd.f32 %v696, %v713
        %v736 = vadd.f32 %v697, %v713
        %v737 = vadd.f32 %v698, %v713
        %v738 = vadd.f32 %v699, %v713
        %v739 = vadd.f32 %v700, %v713
        %v740 = vadd.f32 %v701, %v713
        %v741 = vadd.f32 %v702, %v713
        %v742 = vadd.f32 %v703, %v713
        %v743 = vadd.f32 %v704, %v713
        %v744 = vadd.f32 %v705, %v713
        %v745 = vadd.f32 %v706, %v713
        %v746 = vadd.f32 %v707, %v713
        %v747 = vmax.f32 %v715, 0.0
        %v748 = vmax.f32 %v716, 0.0
        %v749 = vmax.f32 %v717, 0.0
        %v750 = vmax.f32 %v718, 0.0
        %v751 = vmax.f32 %v719, 0.0
        %v752 = vmax.f32 %v720, 0.0
        %v753 = vmax.f32 %v721, 0.0
        %v754 = vmax.f32 %v722, 0.0
        %v755 = vmax.f32 %v723, 0.0
        %v756 = vmax.f32 %v724, 0.0
        %v757 = vmax.f32 %v725, 0.0
        %v758 = vmax.f32 %v726, 0.0
        %v759 = vmax.f32 %v727, 0.0
        %v760 = vmax.f32 %v728, 0.0
        %v761 = vmax.f32 %v729, 0.0
        %v762 = vmax.f32 %v730, 0.0
        %v763 = vmax.f32 %v731, 0.0
        %v764 = vmax.f32 %v732, 0.0
        %v765 = vmax.f32 %v733, 0.0
        %v766 = vmax.f32 %v734, 0.0
        %v767 = vmax.f32 %v735, 0.0
        %v768 = vmax.f32 %v736, 0.0
        %v769 = vmax.f32 %v737, 0.0
        %v770 = vmax.f32 %v738, 0.0
        %v771 = vmax.f32 %v739, 0.0
        %v772 = vmax.f32 %v740, 0.0
        %v773 = vmax.f32 %v741, 0.0
        %v774 = vmax.f32 %v742, 0.0
        %v775 = vmax.f32 %v743, 0.0
        %v776 = vmax.f32 %v744, 0.0
        %v777 = vmax.f32 %v745, 0.0
        %v778 = vmax.f32 %v746, 0.0
        %v779 = vpack.c.bf16 %v748, %v747
        %v780 = vpack.c.bf16 %v750, %v749
        %v781 = vpack.c.bf16 %v752, %v751
        %v782 = vpack.c.bf16 %v754, %v753
        %v783 = vpack.c.bf16 %v756, %v755
        %v784 = vpack.c.bf16 %v758, %v757
        %v785 = vpack.c.bf16 %v760, %v759
        %v786 = vpack.c.bf16 %v762, %v761
        %v787 = vpack.c.bf16 %v764, %v763
        %v788 = vpack.c.bf16 %v766, %v765
        %v789 = vpack.c.bf16 %v768, %v767
        %v790 = vpack.c.bf16 %v770, %v769
        %v791 = vpack.c.bf16 %v772, %v771
        %v792 = vpack.c.bf16 %v774, %v773
        %v793 = vpack.c.bf16 %v776, %v775
        %v794 = vpack.c.bf16 %v778, %v777
        %v795 = vld [vmem:[%s3] sm:$0xf]
        %v796 = vld [vmem:[%s3 + $0x4] sm:$0xf]
        %v797 = vld [vmem:[%s3 + $0x8] sm:$0xf]
        %v798 = vld [vmem:[%s3 + $0xc] sm:$0xf]
        %v799 = vld [vmem:[%s3 + $0x10] sm:$0xf]
        %v800 = vld [vmem:[%s3 + $0x14] sm:$0xf]
        %v801 = vld [vmem:[%s3 + $0x18] sm:$0xf]
        %v802 = vld [vmem:[%s3 + $0x1c] sm:$0xf]
        %v803 = vld [vmem:[%s3 + $0x20] sm:$0xf]
        %v804 = vld [vmem:[%s3 + $0x24] sm:$0xf]
        %v805 = vld [vmem:[%s3 + $0x28] sm:$0xf]
        %v806 = vld [vmem:[%s3 + $0x2c] sm:$0xf]
        %v807 = vld [vmem:[%s3 + $0x30] sm:$0xf]
        %v808 = vld [vmem:[%s3 + $0x34] sm:$0xf]
        %v809 = vld [vmem:[%s3 + $0x38] sm:$0xf]
        %v810 = vld [vmem:[%s3 + $0x3c] sm:$0xf]
        %v811 = vld [vmem:[%s4] sm:$0x1]
        %v813 = vlaneseq
        %v814 = vshrl.u32 %v813, 7
        %v815 = vsub.s32 0, %v814
        %v816 = vrot.slane %v811, %v815
        %v834 = vunpack.c.l.b16 %v795
        %v835 = vunpack.c.l.b16 %v796
        %v836 = vunpack.c.l.b16 %v797
        %v837 = vunpack.c.l.b16 %v798
        %v838 = vunpack.c.l.b16 %v799
        %v839 = vunpack.c.l.b16 %v800
        %v840 = vunpack.c.l.b16 %v801
        %v841 = vunpack.c.l.b16 %v802
        %v842 = vunpack.c.l.b16 %v803
        %v843 = vunpack.c.l.b16 %v804
        %v844 = vunpack.c.l.b16 %v805
        %v845 = vunpack.c.l.b16 %v806
        %v846 = vunpack.c.l.b16 %v807
        %v847 = vunpack.c.l.b16 %v808
        %v848 = vunpack.c.l.b16 %v809
        %v849 = vunpack.c.l.b16 %v810
        %v850 = vpack.c.b16 %v835, %v834
        %v851 = vpack.c.b16 %v837, %v836
        %v852 = vpack.c.b16 %v839, %v838
        %v853 = vpack.c.b16 %v841, %v840
        %v854 = vpack.c.b16 %v843, %v842
        %v855 = vpack.c.b16 %v845, %v844
        %v856 = vpack.c.b16 %v847, %v846
        %v857 = vpack.c.b16 %v849, %v848
        %866 = vmatprep.subr.bf16.mxu0 0
        %867 = vmatpush1.bf16.msra.mxu0 %v857
        %868 = vmatprep.subr.bf16.mxu0 0
        %869 = vmatpush1.bf16.msra.mxu0 %v856
        %870 = vmatprep.subr.bf16.mxu0 0
        %871 = vmatpush1.bf16.msra.mxu0 %v855
        %872 = vmatprep.subr.bf16.mxu0 0
        %873 = vmatpush1.bf16.msra.mxu0 %v854
        %874 = vmatprep.subr.bf16.mxu0 0
        %875 = vmatpush1.bf16.msra.mxu0 %v853
        %876 = vmatprep.subr.bf16.mxu0 0
        %877 = vmatpush1.bf16.msra.mxu0 %v852
        %878 = vmatprep.subr.bf16.mxu0 0
        %879 = vmatpush1.bf16.msra.mxu0 %v851
        %880 = vmatprep.subr.bf16.mxu0 0
        %881 = vmatpush1.bf16.msra.mxu0 %v850
        %882 = vmatprep.subr.bf16.mxu0 0
        %883 = vmatpush2.bf16.msra.mxu0 0
        %884 = vmatprep.subr.bf16.mxu0 0
        %885 = vmatpush2.bf16.msra.mxu0 0
        %886 = vmatprep.subr.bf16.mxu0 0
        %887 = vmatpush2.bf16.msra.mxu0 0
        %888 = vmatprep.subr.bf16.mxu0 0
        %889 = vmatpush2.bf16.msra.mxu0 0
        %890 = vmatprep.subr.bf16.mxu0 0
        %891 = vmatpush2.bf16.msra.mxu0 0
        %892 = vmatprep.subr.bf16.mxu0 0
        %893 = vmatpush2.bf16.msra.mxu0 0
        %894 = vmatprep.subr.bf16.mxu0 0
        %895 = vmatpush2.bf16.msra.mxu0 0
        %896 = vmatprep.subr.bf16.mxu0 0
        %897 = vmatpush2.bf16.msra.mxu0 0
        %898 = vmatprep.mubr.bf16.mxu0 0
        %899 = vmatmul.mubr.bf16.gmra.mxu0 %v779
        %v900 = vpop.f32.mrf.mxu0
        %v901 = vadd.f32 %v816, %v900
        %v902 = vpop.f32.mrf.mxu0
        %v903 = vpop.f32.mrf.mxu0
        %v904 = vadd.f32 %v816, %v903
        %v905 = vpop.f32.mrf.mxu0
        %906 = vmatprep.mubr.bf16.mxu0 0
        %907 = vmatmul.mubr.bf16.gmra.mxu0 %v780
        %v908 = vpop.f32.mrf.mxu0
        %v909 = vadd.f32 %v816, %v908
        %v910 = vpop.f32.mrf.mxu0
        %v911 = vpop.f32.mrf.mxu0
        %v912 = vadd.f32 %v816, %v911
        %v913 = vpop.f32.mrf.mxu0
        %914 = vmatprep.mubr.bf16.mxu0 0
        %915 = vmatmul.mubr.bf16.gmra.mxu0 %v781
        %v916 = vpop.f32.mrf.mxu0
        %v917 = vadd.f32 %v816, %v916
        %v918 = vpop.f32.mrf.mxu0
        %v919 = vpop.f32.mrf.mxu0
        %v920 = vadd.f32 %v816, %v919
        %v921 = vpop.f32.mrf.mxu0
        %922 = vmatprep.mubr.bf16.mxu0 0
        %923 = vmatmul.mubr.bf16.gmra.mxu0 %v782
        %v924 = vpop.f32.mrf.mxu0
        %v925 = vadd.f32 %v816, %v924
        %v926 = vpop.f32.mrf.mxu0
        %v927 = vpop.f32.mrf.mxu0
        %v928 = vadd.f32 %v816, %v927
        %v929 = vpop.f32.mrf.mxu0
        %930 = vmatprep.mubr.bf16.mxu0 0
        %931 = vmatmul.mubr.bf16.gmra.mxu0 %v783
        %v932 = vpop.f32.mrf.mxu0
        %v933 = vadd.f32 %v816, %v932
        %v934 = vpop.f32.mrf.mxu0
        %v935 = vpop.f32.mrf.mxu0
        %v936 = vadd.f32 %v816, %v935
        %v937 = vpop.f32.mrf.mxu0
        %938 = vmatprep.mubr.bf16.mxu0 0
        %939 = vmatmul.mubr.bf16.gmra.mxu0 %v784
        %v940 = vpop.f32.mrf.mxu0
        %v941 = vadd.f32 %v816, %v940
        %v942 = vpop.f32.mrf.mxu0
        %v943 = vpop.f32.mrf.mxu0
        %v944 = vadd.f32 %v816, %v943
        %v945 = vpop.f32.mrf.mxu0
        %946 = vmatprep.mubr.bf16.mxu0 0
        %947 = vmatmul.mubr.bf16.gmra.mxu0 %v785
        %v948 = vpop.f32.mrf.mxu0
        %v949 = vadd.f32 %v816, %v948
        %v950 = vpop.f32.mrf.mxu0
        %v951 = vpop.f32.mrf.mxu0
        %v952 = vadd.f32 %v816, %v951
        %v953 = vpop.f32.mrf.mxu0
        %954 = vmatprep.mubr.bf16.mxu0 0
        %955 = vmatmul.mubr.bf16.gmra.mxu0 %v786
        %v956 = vpop.f32.mrf.mxu0
        %v957 = vadd.f32 %v816, %v956
        %v958 = vpop.f32.mrf.mxu0
        %v959 = vpop.f32.mrf.mxu0
        %v960 = vadd.f32 %v816, %v959
        %v961 = vpop.f32.mrf.mxu0
        %962 = vmatprep.mubr.bf16.mxu0 0
        %963 = vmatmul.mubr.bf16.gmra.mxu0 %v787
        %v964 = vpop.f32.mrf.mxu0
        %v965 = vadd.f32 %v816, %v964
        %v966 = vpop.f32.mrf.mxu0
        %v967 = vpop.f32.mrf.mxu0
        %v968 = vadd.f32 %v816, %v967
        %v969 = vpop.f32.mrf.mxu0
        %970 = vmatprep.mubr.bf16.mxu0 0
        %971 = vmatmul.mubr.bf16.gmra.mxu0 %v788
        %v972 = vpop.f32.mrf.mxu0
        %v973 = vadd.f32 %v816, %v972
        %v974 = vpop.f32.mrf.mxu0
        %v975 = vpop.f32.mrf.mxu0
        %v976 = vadd.f32 %v816, %v975
        %v977 = vpop.f32.mrf.mxu0
        %978 = vmatprep.mubr.bf16.mxu0 0
        %979 = vmatmul.mubr.bf16.gmra.mxu0 %v789
        %v980 = vpop.f32.mrf.mxu0
        %v981 = vadd.f32 %v816, %v980
        %v982 = vpop.f32.mrf.mxu0
        %v983 = vpop.f32.mrf.mxu0
        %v984 = vadd.f32 %v816, %v983
        %v985 = vpop.f32.mrf.mxu0
        %986 = vmatprep.mubr.bf16.mxu0 0
        %987 = vmatmul.mubr.bf16.gmra.mxu0 %v790
        %v988 = vpop.f32.mrf.mxu0
        %v989 = vadd.f32 %v816, %v988
        %v990 = vpop.f32.mrf.mxu0
        %v991 = vpop.f32.mrf.mxu0
        %v992 = vadd.f32 %v816, %v991
        %v993 = vpop.f32.mrf.mxu0
        %994 = vmatprep.mubr.bf16.mxu0 0
        %995 = vmatmul.mubr.bf16.gmra.mxu0 %v791
        %v996 = vpop.f32.mrf.mxu0
        %v997 = vadd.f32 %v816, %v996
        %v998 = vpop.f32.mrf.mxu0
        %v999 = vpop.f32.mrf.mxu0
        %v1000 = vadd.f32 %v816, %v999
        %v1001 = vpop.f32.mrf.mxu0
        %1002 = vmatprep.mubr.bf16.mxu0 0
        %1003 = vmatmul.mubr.bf16.gmra.mxu0 %v792
        %v1004 = vpop.f32.mrf.mxu0
        %v1005 = vadd.f32 %v816, %v1004
        %v1006 = vpop.f32.mrf.mxu0
        %v1007 = vpop.f32.mrf.mxu0
        %v1008 = vadd.f32 %v816, %v1007
        %v1009 = vpop.f32.mrf.mxu0
        %1010 = vmatprep.mubr.bf16.mxu0 0
        %1011 = vmatmul.mubr.bf16.gmra.mxu0 %v793
        %v1012 = vpop.f32.mrf.mxu0
        %v1013 = vadd.f32 %v816, %v1012
        %v1014 = vpop.f32.mrf.mxu0
        %v1015 = vpop.f32.mrf.mxu0
        %v1016 = vadd.f32 %v816, %v1015
        %v1017 = vpop.f32.mrf.mxu0
        %1018 = vmatprep.mubr.bf16.mxu0 0
        %1019 = vmatmul.mubr.bf16.gmra.mxu0 %v794
        %v1020 = vpop.f32.mrf.mxu0
        %v1021 = vadd.f32 %v816, %v1020
        %v1022 = vpop.f32.mrf.mxu0
        %v1023 = vpop.f32.mrf.mxu0
        %v1024 = vadd.f32 %v816, %v1023
        %v1025 = vpop.f32.mrf.mxu0
        %1026 = vdwg.mxu0
        %v1027 = vmax.f32 %v901, 0.0
        %v1028 = vmax.f32 %v904, 0.0
        %v1029 = vmax.f32 %v909, 0.0
        %v1030 = vmax.f32 %v912, 0.0
        %v1031 = vmax.f32 %v917, 0.0
        %v1032 = vmax.f32 %v920, 0.0
        %v1033 = vmax.f32 %v925, 0.0
        %v1034 = vmax.f32 %v928, 0.0
        %v1035 = vmax.f32 %v933, 0.0
        %v1036 = vmax.f32 %v936, 0.0
        %v1037 = vmax.f32 %v941, 0.0
        %v1038 = vmax.f32 %v944, 0.0
        %v1039 = vmax.f32 %v949, 0.0
        %v1040 = vmax.f32 %v952, 0.0
        %v1041 = vmax.f32 %v957, 0.0
        %v1042 = vmax.f32 %v960, 0.0
        %v1043 = vmax.f32 %v965, 0.0
        %v1044 = vmax.f32 %v968, 0.0
        %v1045 = vmax.f32 %v973, 0.0
        %v1046 = vmax.f32 %v976, 0.0
        %v1047 = vmax.f32 %v981, 0.0
        %v1048 = vmax.f32 %v984, 0.0
        %v1049 = vmax.f32 %v989, 0.0
        %v1050 = vmax.f32 %v992, 0.0
        %v1051 = vmax.f32 %v997, 0.0
        %v1052 = vmax.f32 %v1000, 0.0
        %v1053 = vmax.f32 %v1005, 0.0
        %v1054 = vmax.f32 %v1008, 0.0
        %v1055 = vmax.f32 %v1013, 0.0
        %v1056 = vmax.f32 %v1016, 0.0
        %v1057 = vmax.f32 %v1021, 0.0
        %v1058 = vmax.f32 %v1024, 0.0
        %v1059 = vld [vmem:[%s5] sm:$0x1]
        %v1061 = vlaneseq
        %v1062 = vshrl.u32 %v1061, 7
        %v1063 = vsub.s32 0, %v1062
        %v1064 = vrot.slane %v1059, %v1063
        %v1066 = vmul.f32 %v1027, %v1064
        %v1067 = vmul.f32 %v1028, %v1064
        %v1068 = vmul.f32 %v1029, %v1064
        %v1069 = vmul.f32 %v1030, %v1064
        %v1070 = vmul.f32 %v1031, %v1064
        %v1071 = vmul.f32 %v1032, %v1064
        %v1072 = vmul.f32 %v1033, %v1064
        %v1073 = vmul.f32 %v1034, %v1064
        %v1074 = vmul.f32 %v1035, %v1064
        %v1075 = vmul.f32 %v1036, %v1064
        %v1076 = vmul.f32 %v1037, %v1064
        %v1077 = vmul.f32 %v1038, %v1064
        %v1078 = vmul.f32 %v1039, %v1064
        %v1079 = vmul.f32 %v1040, %v1064
        %v1080 = vmul.f32 %v1041, %v1064
        %v1081 = vmul.f32 %v1042, %v1064
        %v1082 = vmul.f32 %v1043, %v1064
        %v1083 = vmul.f32 %v1044, %v1064
        %v1084 = vmul.f32 %v1045, %v1064
        %v1085 = vmul.f32 %v1046, %v1064
        %v1086 = vmul.f32 %v1047, %v1064
        %v1087 = vmul.f32 %v1048, %v1064
        %v1088 = vmul.f32 %v1049, %v1064
        %v1089 = vmul.f32 %v1050, %v1064
        %v1090 = vmul.f32 %v1051, %v1064
        %v1091 = vmul.f32 %v1052, %v1064
        %v1092 = vmul.f32 %v1053, %v1064
        %v1093 = vmul.f32 %v1054, %v1064
        %v1094 = vmul.f32 %v1055, %v1064
        %v1095 = vmul.f32 %v1056, %v1064
        %v1096 = vmul.f32 %v1057, %v1064
        %v1097 = vmul.f32 %v1058, %v1064
        %1098 = vadd.xlane.f32.xlu0 %v1066
        %v1099 = vpop.xlane.xlu0 %1098
        %1100 = vadd.xlane.f32.xlu0 %v1067
        %v1101 = vpop.xlane.xlu0 %1100
        %1102 = vadd.xlane.f32.xlu0 %v1068
        %v1103 = vpop.xlane.xlu0 %1102
        %1104 = vadd.xlane.f32.xlu0 %v1069
        %v1105 = vpop.xlane.xlu0 %1104
        %1106 = vadd.xlane.f32.xlu0 %v1070
        %v1107 = vpop.xlane.xlu0 %1106
        %1108 = vadd.xlane.f32.xlu0 %v1071
        %v1109 = vpop.xlane.xlu0 %1108
        %1110 = vadd.xlane.f32.xlu0 %v1072
        %v1111 = vpop.xlane.xlu0 %1110
        %1112 = vadd.xlane.f32.xlu0 %v1073
        %v1113 = vpop.xlane.xlu0 %1112
        %1114 = vadd.xlane.f32.xlu0 %v1074
        %v1115 = vpop.xlane.xlu0 %1114
        %1116 = vadd.xlane.f32.xlu0 %v1075
        %v1117 = vpop.xlane.xlu0 %1116
        %1118 = vadd.xlane.f32.xlu0 %v1076
        %v1119 = vpop.xlane.xlu0 %1118
        %1120 = vadd.xlane.f32.xlu0 %v1077
        %v1121 = vpop.xlane.xlu0 %1120
        %1122 = vadd.xlane.f32.xlu0 %v1078
        %v1123 = vpop.xlane.xlu0 %1122
        %1124 = vadd.xlane.f32.xlu0 %v1079
        %v1125 = vpop.xlane.xlu0 %1124
        %1126 = vadd.xlane.f32.xlu0 %v1080
        %v1127 = vpop.xlane.xlu0 %1126
        %1128 = vadd.xlane.f32.xlu0 %v1081
        %v1129 = vpop.xlane.xlu0 %1128
        %1130 = vadd.xlane.f32.xlu0 %v1082
        %v1131 = vpop.xlane.xlu0 %1130
        %1132 = vadd.xlane.f32.xlu0 %v1083
        %v1133 = vpop.xlane.xlu0 %1132
        %1134 = vadd.xlane.f32.xlu0 %v1084
        %v1135 = vpop.xlane.xlu0 %1134
        %1136 = vadd.xlane.f32.xlu0 %v1085
        %v1137 = vpop.xlane.xlu0 %1136
        %1138 = vadd.xlane.f32.xlu0 %v1086
        %v1139 = vpop.xlane.xlu0 %1138
        %1140 = vadd.xlane.f32.xlu0 %v1087
        %v1141 = vpop.xlane.xlu0 %1140
        %1142 = vadd.xlane.f32.xlu0 %v1088
        %v1143 = vpop.xlane.xlu0 %1142
        %1144 = vadd.xlane.f32.xlu0 %v1089
        %v1145 = vpop.xlane.xlu0 %1144
        %1146 = vadd.xlane.f32.xlu0 %v1090
        %v1147 = vpop.xlane.xlu0 %1146
        %1148 = vadd.xlane.f32.xlu0 %v1091
        %v1149 = vpop.xlane.xlu0 %1148
        %1150 = vadd.xlane.f32.xlu0 %v1092
        %v1151 = vpop.xlane.xlu0 %1150
        %1152 = vadd.xlane.f32.xlu0 %v1093
        %v1153 = vpop.xlane.xlu0 %1152
        %1154 = vadd.xlane.f32.xlu0 %v1094
        %v1155 = vpop.xlane.xlu0 %1154
        %1156 = vadd.xlane.f32.xlu0 %v1095
        %v1157 = vpop.xlane.xlu0 %1156
        %1158 = vadd.xlane.f32.xlu0 %v1096
        %v1159 = vpop.xlane.xlu0 %1158
        %1160 = vadd.xlane.f32.xlu0 %v1097
        %v1161 = vpop.xlane.xlu0 %1160
        %v1162 = vld [vmem:[#allocation2] sm:$0x1]
        %v1164 = vlaneseq
        %v1165 = vshrl.u32 %v1164, 7
        %v1166 = vsub.s32 0, %v1165
        %v1167 = vrot.slane %v1162, %v1166
        %1168 = vset.pattern.permute.xlu0 0
        %1169 = vperm.xlu0 %1168, %v1167
        %v1170 = vpop.permute.xlu0 %1169
        %v1172 = vadd.f32 %v1099, %v1170
        %v1173 = vadd.f32 %v1101, %v1170
        %v1174 = vadd.f32 %v1103, %v1170
        %v1175 = vadd.f32 %v1105, %v1170
        %v1176 = vadd.f32 %v1107, %v1170
        %v1177 = vadd.f32 %v1109, %v1170
        %v1178 = vadd.f32 %v1111, %v1170
        %v1179 = vadd.f32 %v1113, %v1170
        %v1180 = vadd.f32 %v1115, %v1170
        %v1181 = vadd.f32 %v1117, %v1170
        %v1182 = vadd.f32 %v1119, %v1170
        %v1183 = vadd.f32 %v1121, %v1170
        %v1184 = vadd.f32 %v1123, %v1170
        %v1185 = vadd.f32 %v1125, %v1170
        %v1186 = vadd.f32 %v1127, %v1170
        %v1187 = vadd.f32 %v1129, %v1170
        %v1188 = vadd.f32 %v1131, %v1170
        %v1189 = vadd.f32 %v1133, %v1170
        %v1190 = vadd.f32 %v1135, %v1170
        %v1191 = vadd.f32 %v1137, %v1170
        %v1192 = vadd.f32 %v1139, %v1170
        %v1193 = vadd.f32 %v1141, %v1170
        %v1194 = vadd.f32 %v1143, %v1170
        %v1195 = vadd.f32 %v1145, %v1170
        %v1196 = vadd.f32 %v1147, %v1170
        %v1197 = vadd.f32 %v1149, %v1170
        %v1198 = vadd.f32 %v1151, %v1170
        %v1199 = vadd.f32 %v1153, %v1170
        %v1200 = vadd.f32 %v1155, %v1170
        %v1201 = vadd.f32 %v1157, %v1170
        %v1202 = vadd.f32 %v1159, %v1170
        %v1203 = vadd.f32 %v1161, %v1170
        %v1236 = vlaneseq
        %v1237 = vand.u32 %v1236, 127
        %v1238 = vlaneseq
        %v1239 = vshrl.u32 %v1238, 7
        %v1240 = vsub.s32 %v1237, %v1239
        %v1241 = vrot.slane %v1172, %v1240
        %v1242 = vadd.s32 %v1237, 4294967288
        %v1243 = vlaneseq
        %v1244 = vshrl.u32 %v1243, 7
        %v1245 = vsub.s32 %v1242, %v1244
        %v1246 = vrot.slane %v1173, %v1245
        %vm1247 = vcmask 130112
        %v1248 = vsel %vm1247, %v1246, %v1241
        %v1249 = vadd.s32 %v1237, 4294967280
        %v1250 = vlaneseq
        %v1251 = vshrl.u32 %v1250, 7
        %v1252 = vsub.s32 %v1249, %v1251
        %v1253 = vrot.slane %v1174, %v1252
        %vm1254 = vcmask 195712
        %v1255 = vsel %vm1254, %v1253, %v1248
        %v1256 = vadd.s32 %v1237, 4294967272
        %v1257 = vlaneseq
        %v1258 = vshrl.u32 %v1257, 7
        %v1259 = vsub.s32 %v1256, %v1258
        %v1260 = vrot.slane %v1175, %v1259
        %vm1261 = vcmask 261312
        %v1262 = vsel %vm1261, %v1260, %v1255
        %v1263 = vadd.s32 %v1237, 4294967264
        %v1264 = vlaneseq
        %v1265 = vshrl.u32 %v1264, 7
        %v1266 = vsub.s32 %v1263, %v1265
        %v1267 = vrot.slane %v1176, %v1266
        %vm1268 = vcmask 326912
        %v1269 = vsel %vm1268, %v1267, %v1262
        %v1270 = vadd.s32 %v1237, 4294967256
        %v1271 = vlaneseq
        %v1272 = vshrl.u32 %v1271, 7
        %v1273 = vsub.s32 %v1270, %v1272
        %v1274 = vrot.slane %v1177, %v1273
        %vm1275 = vcmask 392512
        %v1276 = vsel %vm1275, %v1274, %v1269
        %v1277 = vadd.s32 %v1237, 4294967248
        %v1278 = vlaneseq
        %v1279 = vshrl.u32 %v1278, 7
        %v1280 = vsub.s32 %v1277, %v1279
        %v1281 = vrot.slane %v1178, %v1280
        %vm1282 = vcmask 458112
        %v1283 = vsel %vm1282, %v1281, %v1276
        %v1284 = vadd.s32 %v1237, 4294967240
        %v1285 = vlaneseq
        %v1286 = vshrl.u32 %v1285, 7
        %v1287 = vsub.s32 %v1284, %v1286
        %v1288 = vrot.slane %v1179, %v1287
        %vm1289 = vcmask 523712
        %v1290 = vsel %vm1289, %v1288, %v1283
        %v1291 = vadd.s32 %v1237, 4294967232
        %v1292 = vlaneseq
        %v1293 = vshrl.u32 %v1292, 7
        %v1294 = vsub.s32 %v1291, %v1293
        %v1295 = vrot.slane %v1180, %v1294
        %vm1296 = vcmask 589312
        %v1297 = vsel %vm1296, %v1295, %v1290
        %v1298 = vadd.s32 %v1237, 4294967224
        %v1299 = vlaneseq
        %v1300 = vshrl.u32 %v1299, 7
        %v1301 = vsub.s32 %v1298, %v1300
        %v1302 = vrot.slane %v1181, %v1301
        %vm1303 = vcmask 654912
        %v1304 = vsel %vm1303, %v1302, %v1297
        %v1305 = vadd.s32 %v1237, 4294967216
        %v1306 = vlaneseq
        %v1307 = vshrl.u32 %v1306, 7
        %v1308 = vsub.s32 %v1305, %v1307
        %v1309 = vrot.slane %v1182, %v1308
        %vm1310 = vcmask 720512
        %v1311 = vsel %vm1310, %v1309, %v1304
        %v1312 = vadd.s32 %v1237, 4294967208
        %v1313 = vlaneseq
        %v1314 = vshrl.u32 %v1313, 7
        %v1315 = vsub.s32 %v1312, %v1314
        %v1316 = vrot.slane %v1183, %v1315
        %vm1317 = vcmask 786112
        %v1318 = vsel %vm1317, %v1316, %v1311
        %v1319 = vadd.s32 %v1237, 4294967200
        %v1320 = vlaneseq
        %v1321 = vshrl.u32 %v1320, 7
        %v1322 = vsub.s32 %v1319, %v1321
        %v1323 = vrot.slane %v1184, %v1322
        %vm1324 = vcmask 851712
        %v1325 = vsel %vm1324, %v1323, %v1318
        %v1326 = vadd.s32 %v1237, 4294967192
        %v1327 = vlaneseq
        %v1328 = vshrl.u32 %v1327, 7
        %v1329 = vsub.s32 %v1326, %v1328
        %v1330 = vrot.slane %v1185, %v1329
        %vm1331 = vcmask 917312
        %v1332 = vsel %vm1331, %v1330, %v1325
        %v1333 = vadd.s32 %v1237, 4294967184
        %v1334 = vlaneseq
        %v1335 = vshrl.u32 %v1334, 7
        %v1336 = vsub.s32 %v1333, %v1335
        %v1337 = vrot.slane %v1186, %v1336
        %vm1338 = vcmask 982912
        %v1339 = vsel %vm1338, %v1337, %v1332
        %v1340 = vadd.s32 %v1237, 4294967176
        %v1341 = vlaneseq
        %v1342 = vshrl.u32 %v1341, 7
        %v1343 = vsub.s32 %v1340, %v1342
        %v1344 = vrot.slane %v1187, %v1343
        %vm1345 = vcmask 1048512
        %v1346 = vsel %vm1345, %v1344, %v1339
        %v1347 = vlaneseq
        %v1348 = vshrl.u32 %v1347, 7
        %v1349 = vsub.s32 %v1237, %v1348
        %v1350 = vrot.slane %v1188, %v1349
        %v1351 = vlaneseq
        %v1352 = vshrl.u32 %v1351, 7
        %v1353 = vsub.s32 %v1242, %v1352
        %v1354 = vrot.slane %v1189, %v1353
        %v1355 = vsel %vm1247, %v1354, %v1350
        %v1356 = vlaneseq
        %v1357 = vshrl.u32 %v1356, 7
        %v1358 = vsub.s32 %v1249, %v1357
        %v1359 = vrot.slane %v1190, %v1358
        %v1360 = vsel %vm1254, %v1359, %v1355
        %v1361 = vlaneseq
        %v1362 = vshrl.u32 %v1361, 7
        %v1363 = vsub.s32 %v1256, %v1362
        %v1364 = vrot.slane %v1191, %v1363
        %v1365 = vsel %vm1261, %v1364, %v1360
        %v1366 = vlaneseq
        %v1367 = vshrl.u32 %v1366, 7
        %v1368 = vsub.s32 %v1263, %v1367
        %v1369 = vrot.slane %v1192, %v1368
        %v1370 = vsel %vm1268, %v1369, %v1365
        %v1371 = vlaneseq
        %v1372 = vshrl.u32 %v1371, 7
        %v1373 = vsub.s32 %v1270, %v1372
        %v1374 = vrot.slane %v1193, %v1373
        %v1375 = vsel %vm1275, %v1374, %v1370
        %v1376 = vlaneseq
        %v1377 = vshrl.u32 %v1376, 7
        %v1378 = vsub.s32 %v1277, %v1377
        %v1379 = vrot.slane %v1194, %v1378
        %v1380 = vsel %vm1282, %v1379, %v1375
        %v1381 = vlaneseq
        %v1382 = vshrl.u32 %v1381, 7
        %v1383 = vsub.s32 %v1284, %v1382
        %v1384 = vrot.slane %v1195, %v1383
        %v1385 = vsel %vm1289, %v1384, %v1380
        %v1386 = vlaneseq
        %v1387 = vshrl.u32 %v1386, 7
        %v1388 = vsub.s32 %v1291, %v1387
        %v1389 = vrot.slane %v1196, %v1388
        %v1390 = vsel %vm1296, %v1389, %v1385
        %v1391 = vlaneseq
        %v1392 = vshrl.u32 %v1391, 7
        %v1393 = vsub.s32 %v1298, %v1392
        %v1394 = vrot.slane %v1197, %v1393
        %v1395 = vsel %vm1303, %v1394, %v1390
        %v1396 = vlaneseq
        %v1397 = vshrl.u32 %v1396, 7
        %v1398 = vsub.s32 %v1305, %v1397
        %v1399 = vrot.slane %v1198, %v1398
        %v1400 = vsel %vm1310, %v1399, %v1395
        %v1401 = vlaneseq
        %v1402 = vshrl.u32 %v1401, 7
        %v1403 = vsub.s32 %v1312, %v1402
        %v1404 = vrot.slane %v1199, %v1403
        %v1405 = vsel %vm1317, %v1404, %v1400
        %v1406 = vlaneseq
        %v1407 = vshrl.u32 %v1406, 7
        %v1408 = vsub.s32 %v1319, %v1407
        %v1409 = vrot.slane %v1200, %v1408
        %v1410 = vsel %vm1324, %v1409, %v1405
        %v1411 = vlaneseq
        %v1412 = vshrl.u32 %v1411, 7
        %v1413 = vsub.s32 %v1326, %v1412
        %v1414 = vrot.slane %v1201, %v1413
        %v1415 = vsel %vm1331, %v1414, %v1410
        %v1416 = vlaneseq
        %v1417 = vshrl.u32 %v1416, 7
        %v1418 = vsub.s32 %v1333, %v1417
        %v1419 = vrot.slane %v1202, %v1418
        %v1420 = vsel %vm1338, %v1419, %v1415
        %v1421 = vlaneseq
        %v1422 = vshrl.u32 %v1421, 7
        %v1423 = vsub.s32 %v1340, %v1422
        %v1424 = vrot.slane %v1203, %v1423
        %v1425 = vsel %vm1345, %v1424, %v1420
        %vm1426 = vcmask 1041409
        %v1427 = vsel %vm1426, %v1425, %v1346
        %1429 = vst [vmem:[%s274] sm:$0x3] %v1427
        %s1430 = sand.u32 %s183, 1
        %s1431 = scalar_lea.sflag [#allocation4], %s1430
        %s1432 = sand.u32 %s183, 1
        %s1433 = smul.addr %s1432, 2
        %s1434 = scalar_lea.vmem [#allocation3], %s1433
        // Predicated region
        $region49: #{tpu_custom_call.1} parent=47 // pred_check
          %p1435 = pneg %p193
        $region50: #{tpu_custom_call.1} parent=47 // pred_check_branch
          %1437 = sbr.rel (%p1435) target = $region52
        $region51: #{tpu_custom_call.1} parent=47 // pred_region
          %s1439 = ssub.s32 32, 32
          %1440 = vsyncadd %s1431, %s1439
          %s1441 = smul.addr %s23, 32
          %s1442 = scalar_lea.hbm %s7, %s1441
          %s1444 = sshll.u32 %s1434, 4
          %s1445 = int_to_ptr.vmem [resolvable:$true] %s1444
          %1447 = dma.vmem_to_hbm [thread:$0]  %s1445, 32, %s1442, %s1431
        $region52: #{tpu_custom_call.1} parent=47 // pred_fallthru
          _
      $region48: #{tpu_custom_call.1} parent=5 // pred_fallthru
        _
      %p1448 = scmp.le.s32.totalorder 2, %s18
      // Predicated region
      $region53: #{tpu_custom_call.1} parent=5 // pred_check
        %p1449 = pneg %p1448
      $region54: #{tpu_custom_call.1} parent=5 // pred_check_branch
        %1451 = sbr.rel (%p1449) target = $region56
      $region55: #{tpu_custom_call.1} parent=5 // pred_region
        %s1452 = ssub.s32 %s18, 2
        // Predicated region
        $region57: #{tpu_custom_call.1} parent=55 // pred_check
          %p1453 = pneg %p199
        $region58: #{tpu_custom_call.1} parent=55 // pred_check_branch
          %1455 = sbr.rel (%p1453) target = $region60
        $region59: #{tpu_custom_call.1} parent=55 // pred_region
          %s1456 = sand.u32 %s184, 1
          %s1457 = scalar_lea.sflag [#allocation4], %s1456
          %s1458 = sand.u32 %s184, 1
          %s1459 = smul.addr %s1458, 2
          %s1460 = scalar_lea.vmem [#allocation3], %s1459
          %1461 = dma.done %s1457, 32
        $region60: #{tpu_custom_call.1} parent=55 // pred_fallthru
          _
      $region56: #{tpu_custom_call.1} parent=5 // pred_fallthru
        _
    $region6: #{tpu_custom_call.1} parent=1 // loop_footer
      %s22 = sadd.s32 1, %s18
    $region7: #{tpu_custom_call.1} parent=1 // loop_footer_branch
      %17 = sbr.rel target = $region3
    $region8: #{tpu_custom_call.1} parent=1 // loop_exit
      _
    %1462 = vsyncpa [#allocation4], 1
    %s1463 = scalar_lea.sflag [#allocation4], 1
    %1464 = vsyncpa %s1463, 1

</llo_original>
